<compile_context>
chip_gen: v6e
topology: v6e:2x2x1
jax: 0.10.0
libtpu: 0.0.40
codegen_flags: <defaults>
</compile_context>

<pallas_src>
import functools

import jax
import jax.numpy as jnp
from jax import lax
from jax.experimental import pallas as pl
from jax.experimental.pallas import tpu as pltpu

_BIG_NEG = -99999999.0


def _l2_normalize(x):
    """F.normalize(p=2, dim=1): x / max(||x||, 1e-12), via rsqrt (EUP slot)."""
    x = x.astype(jnp.float32)
    ssq = jnp.sum(x * x, axis=1, keepdims=True)
    return x * lax.rsqrt(jnp.maximum(ssq, jnp.float32(1e-24)))


def _circle_pair_loss_kernel(
    xr_ref, xc_ref, tr_ref, tc_ref,          # inputs (row tile, col tile, labels)
    out_ref,                                  # output: per-row softplus, (TR, 1)
    m_p_ref, l_p_ref, m_n_ref, l_n_ref,       # online-LSE scratch, (TR, 1) f32
    *, s, m, n_valid, mask_pad_cols, mm_dtype):
    i = pl.program_id(0)              # row tile index (parallel)
    j = pl.program_id(1)              # column tile index (reduction)
    ncols = pl.num_programs(1)

    @pl.when(j == 0)
    def _init():
        m_p_ref[...] = jnp.full_like(m_p_ref, _BIG_NEG)
        m_n_ref[...] = jnp.full_like(m_n_ref, _BIG_NEG)
        l_p_ref[...] = jnp.zeros_like(l_p_ref)
        l_n_ref[...] = jnp.zeros_like(l_n_ref)

    # Normalize both tiles in f32, cast the MXU operands (bf16-native MXU on
    # v5e/v6e/v7x); accumulation stays f32.
    xr = _l2_normalize(xr_ref[...]).astype(mm_dtype)          # (TR, D)
    xc = _l2_normalize(xc_ref[...]).astype(mm_dtype)          # (TC, D)

    # Cosine-similarity tile: contract D on both operands directly, no x.T.
    dist = lax.dot_general(
        xr, xc, dimension_numbers=(((1,), (1,)), ((), ())),
        preferred_element_type=jnp.float32)                   # (TR, TC)

    TR, TC = dist.shape
    t_r = tr_ref[...]                                         # (TR, 1) int32
    t_c = tc_ref[...]                                         # (1, TC) int32
    same = t_r == t_c                                         # (TR, TC) bool

    # Global indices: diagonal (self-pair) removal + padded-column masking.
    # (Kept unconditional for robustness; the compare is a few VALU ops/elem.)
    rows_g = lax.broadcasted_iota(jnp.int32, (TR, TC), 0) + i * TR
    cols_g = lax.broadcasted_iota(jnp.int32, (TR, TC), 1) + j * TC

    pos = jnp.logical_and(same, rows_g != cols_g)
    neg = jnp.logical_not(same)
    if mask_pad_cols:                                         # static python bool
        valid = cols_g < n_valid
        pos = jnp.logical_and(pos, valid)
        neg = jnp.logical_and(neg, valid)

    big_neg = jnp.float32(_BIG_NEG)
    # Identical to the reference on unmasked lanes (s_p == dist there); masked
    # lanes pinned to BIG_NEG which vanishes under logsumexp just like the
    # reference's BIG_NEG + O(30) values.
    logit_p = jnp.where(
        pos, (-s) * jnp.maximum(1.0 + m - dist, 0.0) * (dist - (1.0 - m)), big_neg)
    logit_n = jnp.where(
        neg, s * jnp.maximum(dist + m, 0.0) * (dist - m), big_neg)

    def _online_lse(m_ref, l_ref, z):
        m_old = m_ref[...]
        m_new = jnp.maximum(m_old, jnp.max(z, axis=1, keepdims=True))
        l_ref[...] = (l_ref[...] * jnp.exp(m_old - m_new)
                      + jnp.sum(jnp.exp(z - m_new), axis=1, keepdims=True))
        m_ref[...] = m_new

    _online_lse(m_p_ref, l_p_ref, logit_p)
    _online_lse(m_n_ref, l_n_ref, logit_n)

    @pl.when(j == ncols - 1)
    def _finalize():
        # All-masked rows give m = BIG_NEG, l = count > 0 -> lse ~ BIG_NEG,
        # softplus -> 0 (no NaN), matching the reference.
        t = (m_p_ref[...] + jnp.log(l_p_ref[...])
             + m_n_ref[...] + jnp.log(l_n_ref[...]))
        out_ref[...] = jnp.maximum(t, 0.0) + jnp.log1p(jnp.exp(-jnp.abs(t)))


def _round_up(x, k):
    return (x + k - 1) // k * k


def circle_pair_loss(embedding, targets, s=30.0, m=0.3, *,
                     block_rows=256, block_cols=512,
                     matmul_dtype=jnp.bfloat16):
    """embedding: (N, D) float; targets: (N,) int. Returns scalar f32 loss."""
    N, D = embedding.shape
    assert block_rows % 8 == 0 and block_cols % 128 == 0

    tr = min(block_rows, _round_up(N, 8))      # row tile (sublane-aligned)
    tc = min(block_cols, _round_up(N, 128))    # col tile (lane-aligned)
    np_r = _round_up(N, tr)
    np_c = _round_up(N, tc)

    tgt = targets.astype(jnp.int32)
    x_r = embedding if np_r == N else jnp.pad(embedding, ((0, np_r - N), (0, 0)))
    x_c = embedding if np_c == N else jnp.pad(embedding, ((0, np_c - N), (0, 0)))
    t_r = (tgt if np_r == N else
           jnp.pad(tgt, (0, np_r - N), constant_values=-1)).reshape(np_r, 1)
    t_c = (tgt if np_c == N else
           jnp.pad(tgt, (0, np_c - N), constant_values=-1)).reshape(1, np_c)

    kernel = functools.partial(
        _circle_pair_loss_kernel, s=float(s), m=float(m), n_valid=N,
        mask_pad_cols=(np_c != N), mm_dtype=matmul_dtype)

    n_row_tiles = np_r // tr
    n_col_tiles = np_c // tc
    itemsize = jnp.dtype(embedding.dtype).itemsize
    cost = pl.CostEstimate(
        flops=2 * np_r * np_c * D + 16 * np_r * np_c,
        transcendentals=2 * np_r * np_c,
        bytes_accessed=(n_row_tiles * np_c + np_r) * D * itemsize
                       + 8 * np_r + 4 * np_c)

    per_row_softplus = pl.pallas_call(
        kernel,
        out_shape=jax.ShapeDtypeStruct((np_r, 1), jnp.float32),
        grid=(n_row_tiles, n_col_tiles),
        in_specs=[
            pl.BlockSpec((tr, D), lambda i, j: (i, 0)),   # row tile of embedding
            pl.BlockSpec((tc, D), lambda i, j: (j, 0)),   # streamed column tile
            pl.BlockSpec((tr, 1), lambda i, j: (i, 0)),   # row labels (column vec)
            pl.BlockSpec((1, tc), lambda i, j: (0, j)),   # col labels (row vec)
        ],
        out_specs=pl.BlockSpec((tr, 1), lambda i, j: (i, 0)),
        scratch_shapes=[pltpu.VMEM((tr, 1), jnp.float32) for _ in range(4)],
        compiler_params=pltpu.CompilerParams(
            dimension_semantics=("parallel", "arbitrary")),
        cost_estimate=cost,
    )(x_r, x_c, t_r, t_c)

    # Final mean over the N real rows (tiny reduction, kept in JAX so the row
    # grid axis can stay "parallel" across TensorCores).
    return jnp.mean(per_row_softplus[:N, 0])


def _reference(embedding, targets, s=30.0, m=0.3):
    x = embedding.astype(jnp.float32)
    x = x / jnp.maximum(jnp.linalg.norm(x, axis=1, keepdims=True), 1e-12)
    dist = jnp.dot(x, x.T, precision=lax.Precision.HIGHEST)
    N = dist.shape[0]
    is_pos = (targets[:, None] == targets[None, :]).astype(jnp.float32)
    is_neg = 1.0 - is_pos
    is_pos = is_pos - jnp.eye(N, dtype=jnp.float32)
    s_p = dist * is_pos
    s_n = dist * is_neg
    alpha_p = jnp.maximum(-s_p + 1.0 + m, 0.0)
    alpha_n = jnp.maximum(s_n + m, 0.0)
    logit_p = -s * alpha_p * (s_p - (1.0 - m)) + _BIG_NEG * (1.0 - is_pos)
    logit_n = s * alpha_n * (s_n - m) + _BIG_NEG * (1.0 - is_neg)
    lse = lambda z: jax.scipy.special.logsumexp(z, axis=1)
    return jnp.mean(jax.nn.softplus(lse(logit_p) + lse(logit_n)))


if __name__ == "__main__":
    key = jax.random.PRNGKey(0)
    k1, k2, k3, k4 = jax.random.split(key, 4)

    # Small case (single tile): check both f32 and bf16 matmul-operand paths.
    N, D = 8, 32
    emb = jax.random.normal(k1, (N, D), dtype=jnp.float32)
    tgt = jax.random.randint(k2, (N,), 0, 4, dtype=jnp.int32)

    loss_f32 = circle_pair_loss(emb, tgt, s=30.0, m=0.3, matmul_dtype=jnp.float32)
    loss_bf16 = circle_pair_loss(emb, tgt, s=30.0, m=0.3)   # bf16 MXU operands
    jax.block_until_ready((loss_f32, loss_bf16))
    ref = _reference(emb, tgt, s=30.0, m=0.3)
    assert jnp.allclose(loss_f32, ref, rtol=2e-2, atol=2e-2), (loss_f32, ref)
    assert jnp.allclose(loss_bf16, ref, rtol=6e-2, atol=6e-2), (loss_bf16, ref)

    # Larger case: 3x3 tile grid, online logsumexp across column tiles,
    # padded rows/cols, and a singleton class (a row with zero positives).
    N2, D2 = 300, 64
    emb2 = jax.random.normal(k3, (N2, D2), dtype=jnp.float32)
    tgt2 = jax.random.randint(k4, (N2,), 0, 7, dtype=jnp.int32)
    tgt2 = tgt2.at[0].set(999)          # row 0 has no positive pair
    loss2 = circle_pair_loss(emb2, tgt2, s=30.0, m=0.3,
                             block_rows=128, block_cols=128)
    jax.block_until_ready(loss2)
    ref2 = _reference(emb2, tgt2, s=30.0, m=0.3)
    assert jnp.allclose(loss2, ref2, rtol=6e-2, atol=6e-2), (loss2, ref2)

    print("KERNEL_OK")
</pallas_src>

<mosaic_0001>
module attributes {stable_mosaic.version = 11 : i64} {
  func.func @_circle_pair_loss_kernel(%arg0: i32, %arg1: i32, %arg2: memref<8x32xf32, #tpu.memory_space<vmem>>, %arg3: memref<128x32xf32, #tpu.memory_space<vmem>>, %arg4: memref<8x1xi32, #tpu.memory_space<vmem>>, %arg5: memref<1x128xi32, #tpu.memory_space<vmem>>, %arg6: memref<8x1xf32, #tpu.memory_space<vmem>>, %arg7: memref<8x1xf32, #tpu.memory_space<vmem>>, %arg8: memref<8x1xf32, #tpu.memory_space<vmem>>, %arg9: memref<8x1xf32, #tpu.memory_space<vmem>>, %arg10: memref<8x1xf32, #tpu.memory_space<vmem>>) attributes {dimension_semantics = [#tpu.dimension_semantics<parallel>, #tpu.dimension_semantics<arbitrary>], iteration_bounds = array<i64: 1, 1>, scalar_prefetch = 0 : i64, scratch_operands = 4 : i64, tpu.core_type = #tpu.core_type<tc>, window_params = [{transform_indices = @transform_0, window_bounds = array<i64: 8, 32>}, {transform_indices = @transform_1, window_bounds = array<i64: 128, 32>}, {transform_indices = @transform_2, window_bounds = array<i64: 8, 1>}, {transform_indices = @transform_3, window_bounds = array<i64: 1, 128>}, {transform_indices = @transform_4, window_bounds = array<i64: 8, 1>}]} {
    %c0_i32 = arith.constant 0 : i32
    %0 = arith.cmpi eq, %arg1, %c0_i32 : i32
    %1 = arith.extui %0 : i1 to i32
    %c0_i32_0 = arith.constant 0 : i32
    %2 = arith.cmpi ne, %1, %c0_i32_0 : i32
    scf.if %2 {
      %cst_46 = arith.constant -1.000000e+08 : f32
      %99 = vector.broadcast %cst_46 : f32 to vector<8x1xf32>
      %c0_47 = arith.constant 0 : index
      %c0_48 = arith.constant 0 : index
      %100 = vector.load %arg7[%c0_47, %c0_48] : memref<8x1xf32, #tpu.memory_space<vmem>>, vector<8x1xf32>
      tpu.vector_store %arg7[%c0_47, %c0_48], %99 {strides = array<i32>} : memref<8x1xf32, #tpu.memory_space<vmem>>, vector<8x1xf32>,
      %cst_49 = arith.constant -1.000000e+08 : f32
      %101 = vector.broadcast %cst_49 : f32 to vector<8x1xf32>
      %c0_50 = arith.constant 0 : index
      %c0_51 = arith.constant 0 : index
      %102 = vector.load %arg9[%c0_50, %c0_51] : memref<8x1xf32, #tpu.memory_space<vmem>>, vector<8x1xf32>
      tpu.vector_store %arg9[%c0_50, %c0_51], %101 {strides = array<i32>} : memref<8x1xf32, #tpu.memory_space<vmem>>, vector<8x1xf32>,
      %cst_52 = arith.constant 0.000000e+00 : f32
      %103 = vector.broadcast %cst_52 : f32 to vector<8x1xf32>
      %c0_53 = arith.constant 0 : index
      %c0_54 = arith.constant 0 : index
      %104 = vector.load %arg8[%c0_53, %c0_54] : memref<8x1xf32, #tpu.memory_space<vmem>>, vector<8x1xf32>
      tpu.vector_store %arg8[%c0_53, %c0_54], %103 {strides = array<i32>} : memref<8x1xf32, #tpu.memory_space<vmem>>, vector<8x1xf32>,
      %cst_55 = arith.constant 0.000000e+00 : f32
      %105 = vector.broadcast %cst_55 : f32 to vector<8x1xf32>
      %c0_56 = arith.constant 0 : index
      %c0_57 = arith.constant 0 : index
      %106 = vector.load %arg10[%c0_56, %c0_57] : memref<8x1xf32, #tpu.memory_space<vmem>>, vector<8x1xf32>
      tpu.vector_store %arg10[%c0_56, %c0_57], %105 {strides = array<i32>} : memref<8x1xf32, #tpu.memory_space<vmem>>, vector<8x1xf32>,
    } else {
    }
    %c0 = arith.constant 0 : index
    %c0_1 = arith.constant 0 : index
    %3 = vector.load %arg2[%c0, %c0_1] : memref<8x32xf32, #tpu.memory_space<vmem>>, vector<8x32xf32>
    %4 = arith.mulf %3, %3 : vector<8x32xf32>
    %cst = arith.constant dense<0.000000e+00> : vector<8xf32>
    %5 = vector.multi_reduction <add>, %4, %cst [1] : vector<8x32xf32> to vector<8xf32>
    %6 = vector.shape_cast %5 : vector<8xf32> to vector<8x1xf32>
    %cst_2 = arith.constant 1.000000e-24 : f32
    %7 = vector.broadcast %cst_2 : f32 to vector<8x1xf32>
    %8 = arith.maximumf %6, %7 : vector<8x1xf32>
    %9 = math.rsqrt %8 : vector<8x1xf32>
    %10 = vector.broadcast %9 : vector<8x1xf32> to vector<8x32xf32>
    %11 = arith.mulf %3, %10 : vector<8x32xf32>
    %c0_3 = arith.constant 0 : index
    %c0_4 = arith.constant 0 : index
    %12 = vector.load %arg3[%c0_3, %c0_4] : memref<128x32xf32, #tpu.memory_space<vmem>>, vector<128x32xf32>
    %13 = arith.mulf %12, %12 : vector<128x32xf32>
    %cst_5 = arith.constant dense<0.000000e+00> : vector<128xf32>
    %14 = vector.multi_reduction <add>, %13, %cst_5 [1] : vector<128x32xf32> to vector<128xf32>
    %15 = vector.shape_cast %14 : vector<128xf32> to vector<128x1xf32>
    %cst_6 = arith.constant 1.000000e-24 : f32
    %16 = vector.broadcast %cst_6 : f32 to vector<128x1xf32>
    %17 = arith.maximumf %15, %16 : vector<128x1xf32>
    %18 = math.rsqrt %17 : vector<128x1xf32>
    %19 = vector.broadcast %18 : vector<128x1xf32> to vector<128x32xf32>
    %20 = arith.mulf %12, %19 : vector<128x32xf32>
    %cst_7 = arith.constant dense<0.000000e+00> : vector<8x128xf32>
    %21 = tpu.matmul %11, %20, %cst_7 {dimension_numbers = #tpu.dot_dimension_numbers<[1], [1], [0], [0], [0, 0, 1, 0], [], []>} : vector<8x32xf32>, vector<128x32xf32>, vector<8x128xf32> -> vector<8x128xf32>
    %c0_8 = arith.constant 0 : index
    %c0_9 = arith.constant 0 : index
    %22 = vector.load %arg4[%c0_8, %c0_9] : memref<8x1xi32, #tpu.memory_space<vmem>>, vector<8x1xi32>
    %c0_10 = arith.constant 0 : index
    %c0_11 = arith.constant 0 : index
    %23 = vector.load %arg5[%c0_10, %c0_11] : memref<1x128xi32, #tpu.memory_space<vmem>>, vector<1x128xi32>
    %24 = vector.broadcast %22 : vector<8x1xi32> to vector<8x128xi32>
    %25 = vector.broadcast %23 : vector<1x128xi32> to vector<8x128xi32>
    %26 = arith.cmpi eq, %24, %25 : vector<8x128xi32>
    %27 = tpu.iota {dimensions = array<i32: 0>} : vector<8x128xi32>
    %c8_i32 = arith.constant 8 : i32
    %28 = arith.muli %arg0, %c8_i32 : i32
    %29 = vector.broadcast %28 : i32 to vector<8x128xi32>
    %30 = arith.addi %27, %29 : vector<8x128xi32>
    %31 = tpu.iota {dimensions = array<i32: 1>} : vector<8x128xi32>
    %c128_i32 = arith.constant 128 : i32
    %32 = arith.muli %arg1, %c128_i32 : i32
    %33 = vector.broadcast %32 : i32 to vector<8x128xi32>
    %34 = arith.addi %31, %33 : vector<8x128xi32>
    %35 = arith.cmpi ne, %30, %34 : vector<8x128xi32>
    %36 = arith.andi %26, %35 : vector<8x128xi1>
    %cst_12 = arith.constant dense<true> : vector<8x128xi1>
    %37 = arith.xori %26, %cst_12 : vector<8x128xi1>
    %c8_i32_13 = arith.constant 8 : i32
    %38 = vector.broadcast %c8_i32_13 : i32 to vector<8x128xi32>
    %39 = arith.cmpi slt, %34, %38 : vector<8x128xi32>
    %40 = arith.andi %36, %39 : vector<8x128xi1>
    %41 = arith.andi %37, %39 : vector<8x128xi1>
    %cst_14 = arith.constant 1.300000e+00 : f32
    %42 = vector.broadcast %cst_14 : f32 to vector<8x128xf32>
    %43 = arith.subf %42, %21 : vector<8x128xf32>
    %cst_15 = arith.constant 0.000000e+00 : f32
    %44 = vector.broadcast %cst_15 : f32 to vector<8x128xf32>
    %45 = arith.maximumf %43, %44 : vector<8x128xf32>
    %cst_16 = arith.constant -3.000000e+01 : f32
    %46 = vector.broadcast %cst_16 : f32 to vector<8x128xf32>
    %47 = arith.mulf %46, %45 : vector<8x128xf32>
    %cst_17 = arith.constant 0.699999988 : f32
    %48 = vector.broadcast %cst_17 : f32 to vector<8x128xf32>
    %49 = arith.subf %21, %48 : vector<8x128xf32>
    %50 = arith.mulf %47, %49 : vector<8x128xf32>
    %cst_18 = arith.constant -1.000000e+08 : f32
    %51 = vector.broadcast %cst_18 : f32 to vector<8x128xf32>
    %52 = arith.select %40, %50, %51 : vector<8x128xi1>, vector<8x128xf32>
    %cst_19 = arith.constant 3.000000e-01 : f32
    %53 = vector.broadcast %cst_19 : f32 to vector<8x128xf32>
    %54 = arith.addf %21, %53 : vector<8x128xf32>
    %cst_20 = arith.constant 0.000000e+00 : f32
    %55 = vector.broadcast %cst_20 : f32 to vector<8x128xf32>
    %56 = arith.maximumf %54, %55 : vector<8x128xf32>
    %cst_21 = arith.constant 3.000000e+01 : f32
    %57 = vector.broadcast %cst_21 : f32 to vector<8x128xf32>
    %58 = arith.mulf %57, %56 : vector<8x128xf32>
    %cst_22 = arith.constant 3.000000e-01 : f32
    %59 = vector.broadcast %cst_22 : f32 to vector<8x128xf32>
    %60 = arith.subf %21, %59 : vector<8x128xf32>
    %61 = arith.mulf %58, %60 : vector<8x128xf32>
    %cst_23 = arith.constant -1.000000e+08 : f32
    %62 = vector.broadcast %cst_23 : f32 to vector<8x128xf32>
    %63 = arith.select %41, %61, %62 : vector<8x128xi1>, vector<8x128xf32>
    %c0_24 = arith.constant 0 : index
    %c0_25 = arith.constant 0 : index
    %64 = vector.load %arg7[%c0_24, %c0_25] : memref<8x1xf32, #tpu.memory_space<vmem>>, vector<8x1xf32>
    %cst_26 = arith.constant dense<0xFF800000> : vector<8xf32>
    %65 = vector.multi_reduction <maximumf>, %52, %cst_26 [1] : vector<8x128xf32> to vector<8xf32>
    %66 = vector.shape_cast %65 : vector<8xf32> to vector<8x1xf32>
    %67 = arith.maximumf %64, %66 : vector<8x1xf32>
    %c0_27 = arith.constant 0 : index
    %c0_28 = arith.constant 0 : index
    %68 = vector.load %arg8[%c0_27, %c0_28] : memref<8x1xf32, #tpu.memory_space<vmem>>, vector<8x1xf32>
    %69 = arith.subf %64, %67 : vector<8x1xf32>
    %70 = math.exp %69 : vector<8x1xf32>
    %71 = arith.mulf %68, %70 : vector<8x1xf32>
    %72 = vector.broadcast %67 : vector<8x1xf32> to vector<8x128xf32>
    %73 = arith.subf %52, %72 : vector<8x128xf32>
    %74 = math.exp %73 : vector<8x128xf32>
    %cst_29 = arith.constant dense<0.000000e+00> : vector<8xf32>
    %75 = vector.multi_reduction <add>, %74, %cst_29 [1] : vector<8x128xf32> to vector<8xf32>
    %76 = vector.shape_cast %75 : vector<8xf32> to vector<8x1xf32>
    %77 = arith.addf %71, %76 : vector<8x1xf32>
    %c0_30 = arith.constant 0 : index
    %c0_31 = arith.constant 0 : index
    %78 = vector.load %arg8[%c0_30, %c0_31] : memref<8x1xf32, #tpu.memory_space<vmem>>, vector<8x1xf32>
    tpu.vector_store %arg8[%c0_30, %c0_31], %77 {strides = array<i32>} : memref<8x1xf32, #tpu.memory_space<vmem>>, vector<8x1xf32>,
    %c0_32 = arith.constant 0 : index
    %c0_33 = arith.constant 0 : index
    %79 = vector.load %arg7[%c0_32, %c0_33] : memref<8x1xf32, #tpu.memory_space<vmem>>, vector<8x1xf32>
    tpu.vector_store %arg7[%c0_32, %c0_33], %67 {strides = array<i32>} : memref<8x1xf32, #tpu.memory_space<vmem>>, vector<8x1xf32>,
    %c0_34 = arith.constant 0 : index
    %c0_35 = arith.constant 0 : index
    %80 = vector.load %arg9[%c0_34, %c0_35] : memref<8x1xf32, #tpu.memory_space<vmem>>, vector<8x1xf32>
    %cst_36 = arith.constant dense<0xFF800000> : vector<8xf32>
    %81 = vector.multi_reduction <maximumf>, %63, %cst_36 [1] : vector<8x128xf32> to vector<8xf32>
    %82 = vector.shape_cast %81 : vector<8xf32> to vector<8x1xf32>
    %83 = arith.maximumf %80, %82 : vector<8x1xf32>
    %c0_37 = arith.constant 0 : index
    %c0_38 = arith.constant 0 : index
    %84 = vector.load %arg10[%c0_37, %c0_38] : memref<8x1xf32, #tpu.memory_space<vmem>>, vector<8x1xf32>
    %85 = arith.subf %80, %83 : vector<8x1xf32>
    %86 = math.exp %85 : vector<8x1xf32>
    %87 = arith.mulf %84, %86 : vector<8x1xf32>
    %88 = vector.broadcast %83 : vector<8x1xf32> to vector<8x128xf32>
    %89 = arith.subf %63, %88 : vector<8x128xf32>
    %90 = math.exp %89 : vector<8x128xf32>
    %cst_39 = arith.constant dense<0.000000e+00> : vector<8xf32>
    %91 = vector.multi_reduction <add>, %90, %cst_39 [1] : vector<8x128xf32> to vector<8xf32>
    %92 = vector.shape_cast %91 : vector<8xf32> to vector<8x1xf32>
    %93 = arith.addf %87, %92 : vector<8x1xf32>
    %c0_40 = arith.constant 0 : index
    %c0_41 = arith.constant 0 : index
    %94 = vector.load %arg10[%c0_40, %c0_41] : memref<8x1xf32, #tpu.memory_space<vmem>>, vector<8x1xf32>
    tpu.vector_store %arg10[%c0_40, %c0_41], %93 {strides = array<i32>} : memref<8x1xf32, #tpu.memory_space<vmem>>, vector<8x1xf32>,
    %c0_42 = arith.constant 0 : index
    %c0_43 = arith.constant 0 : index
    %95 = vector.load %arg9[%c0_42, %c0_43] : memref<8x1xf32, #tpu.memory_space<vmem>>, vector<8x1xf32>
    tpu.vector_store %arg9[%c0_42, %c0_43], %83 {strides = array<i32>} : memref<8x1xf32, #tpu.memory_space<vmem>>, vector<8x1xf32>,
    %c0_i32_44 = arith.constant 0 : i32
    %96 = arith.cmpi eq, %arg1, %c0_i32_44 : i32
    %97 = arith.extui %96 : i1 to i32
    %c0_i32_45 = arith.constant 0 : i32
    %98 = arith.cmpi ne, %97, %c0_i32_45 : i32
    scf.if %98 {
      %c0_46 = arith.constant 0 : index
      %c0_47 = arith.constant 0 : index
      %99 = vector.load %arg7[%c0_46, %c0_47] : memref<8x1xf32, #tpu.memory_space<vmem>>, vector<8x1xf32>
      %c0_48 = arith.constant 0 : index
      %c0_49 = arith.constant 0 : index
      %100 = vector.load %arg8[%c0_48, %c0_49] : memref<8x1xf32, #tpu.memory_space<vmem>>, vector<8x1xf32>
      %101 = math.log %100 : vector<8x1xf32>
      %102 = arith.addf %99, %101 : vector<8x1xf32>
      %c0_50 = arith.constant 0 : index
      %c0_51 = arith.constant 0 : index
      %103 = vector.load %arg9[%c0_50, %c0_51] : memref<8x1xf32, #tpu.memory_space<vmem>>, vector<8x1xf32>
      %104 = arith.addf %102, %103 : vector<8x1xf32>
      %c0_52 = arith.constant 0 : index
      %c0_53 = arith.constant 0 : index
      %105 = vector.load %arg10[%c0_52, %c0_53] : memref<8x1xf32, #tpu.memory_space<vmem>>, vector<8x1xf32>
      %106 = math.log %105 : vector<8x1xf32>
      %107 = arith.addf %104, %106 : vector<8x1xf32>
      %cst_54 = arith.constant 0.000000e+00 : f32
      %108 = vector.broadcast %cst_54 : f32 to vector<8x1xf32>
      %109 = arith.maximumf %107, %108 : vector<8x1xf32>
      %110 = math.absf %107 : vector<8x1xf32>
      %cst_55 = arith.constant 0.000000e+00 : f32
      %111 = vector.broadcast %cst_55 : f32 to vector<8x1xf32>
      %112 = arith.subf %111, %110 : vector<8x1xf32>
      %113 = math.exp %112 : vector<8x1xf32>
      %114 = math.log1p %113 : vector<8x1xf32>
      %115 = arith.addf %109, %114 : vector<8x1xf32>
      %c0_56 = arith.constant 0 : index
      %c0_57 = arith.constant 0 : index
      %116 = vector.load %arg6[%c0_56, %c0_57] : memref<8x1xf32, #tpu.memory_space<vmem>>, vector<8x1xf32>
      tpu.vector_store %arg6[%c0_56, %c0_57], %115 {strides = array<i32>} : memref<8x1xf32, #tpu.memory_space<vmem>>, vector<8x1xf32>,
    } else {
    }
    return
  }
  func.func @transform_0(%arg0: i32, %arg1: i32) -> (i32, i32) {
    %c0_i32 = arith.constant 0 : i32
    %c0_i32_0 = arith.constant 0 : i32
    return %arg0, %c0_i32 : i32, i32
  }
  func.func @transform_1(%arg0: i32, %arg1: i32) -> (i32, i32) {
    %c0_i32 = arith.constant 0 : i32
    %c0_i32_0 = arith.constant 0 : i32
    return %arg1, %c0_i32 : i32, i32
  }
  func.func @transform_2(%arg0: i32, %arg1: i32) -> (i32, i32) {
    %c0_i32 = arith.constant 0 : i32
    %c0_i32_0 = arith.constant 0 : i32
    return %arg0, %c0_i32 : i32, i32
  }
  func.func @transform_3(%arg0: i32, %arg1: i32) -> (i32, i32) {
    %c0_i32 = arith.constant 0 : i32
    %c0_i32_0 = arith.constant 0 : i32
    return %c0_i32, %arg1 : i32, i32
  }
  func.func @transform_4(%arg0: i32, %arg1: i32) -> (i32, i32) {
    %c0_i32 = arith.constant 0 : i32
    %c0_i32_0 = arith.constant 0 : i32
    return %arg0, %c0_i32 : i32, i32
  }
}

</mosaic_0001>

<llo_original>
// kernel: tpu_custom_call.1
$region0: #{tpu_custom_call.1}
  #allocation0 [shape = 'u32[]', space=smem, size = 0x4, offset = 0x4, fixed_abs, tag = 'smem constant byte address 0x4 - core index']
  #allocation1 [shape = 'u32[144,128]{1,0:T(1,128)}', space=vmem, size = 0x12000, scoped, tag = 'internal scratch']
  #allocation2 [shape = 'f32[8,1]{1,0:T(8,128)}', space=vmem, size = 0x1000, scoped, tag = 'scratch operand']
  #allocation3 [shape = 'f32[8,1]{1,0:T(8,128)}', space=vmem, size = 0x1000, scoped, tag = 'scratch operand']
  #allocation4 [shape = 'f32[8,1]{1,0:T(8,128)}', space=vmem, size = 0x1000, scoped, tag = 'scratch operand']
  #allocation5 [shape = 'f32[8,1]{1,0:T(8,128)}', space=vmem, size = 0x1000, scoped, tag = 'scratch operand']
  %s0 = inlined_call_operand.vmem [shape: f32[8,32], index: 0, kind: input, shape index: {}]
  %s1 = inlined_call_operand.vmem [shape: f32[128,32], index: 1, kind: input, shape index: {}]
  %s2 = inlined_call_operand.vmem [shape: s32[8,1], index: 2, kind: input, shape index: {}]
  %s3 = inlined_call_operand.vmem [shape: s32[1,128], index: 3, kind: input, shape index: {}]
  %s4 = inlined_call_operand.vmem [shape: f32[8,1], index: 4, kind: output, shape index: {}]
  %s5 = sld [smem:[#allocation0]]
  $region34: #{tpu_custom_call.1} parent=0
    _
  %s7 = ssub.s32 1, %s5
  %s8 = scalar_select 0, %s7, %s5
  // Predicated region
  $region2: #{tpu_custom_call.1} parent=0 // pred_check
    _
  $region3: #{tpu_custom_call.1} parent=0 // pred_check_branch
    %10 = sbr.rel (0) target = $region5
  $region4: #{tpu_custom_call.1} parent=0 // pred_region
    _
  $region5: #{tpu_custom_call.1} parent=0 // pred_fallthru
    _
  // Predicated region
  $region6: #{tpu_custom_call.1} parent=0 // pred_check
    _
  $region7: #{tpu_custom_call.1} parent=0 // pred_check_branch
    %12 = sbr.rel (0) target = $region9
  $region8: #{tpu_custom_call.1} parent=0 // pred_region
    _
  $region9: #{tpu_custom_call.1} parent=0 // pred_fallthru
    _
  // Predicated region
  $region10: #{tpu_custom_call.1} parent=0 // pred_check
    _
  $region11: #{tpu_custom_call.1} parent=0 // pred_check_branch
    %14 = sbr.rel (0) target = $region13
  $region12: #{tpu_custom_call.1} parent=0 // pred_region
    _
  $region13: #{tpu_custom_call.1} parent=0 // pred_fallthru
    _
  // Predicated region
  $region14: #{tpu_custom_call.1} parent=0 // pred_check
    _
  $region15: #{tpu_custom_call.1} parent=0 // pred_check_branch
    %16 = sbr.rel (0) target = $region17
  $region16: #{tpu_custom_call.1} parent=0 // pred_region
    _
  $region17: #{tpu_custom_call.1} parent=0 // pred_fallthru
    _
  %p17 = scmp.eq.s32.totalorder 0, 0
  // Predicated region
  $region18: #{tpu_custom_call.1} parent=0 // pred_check
    %p18 = pneg %p17
  $region19: #{tpu_custom_call.1} parent=0 // pred_check_branch
    %20 = sbr.rel (%p18) target = $region21
  $region20: #{tpu_custom_call.1} parent=0 // pred_region
    %vm21 = vcmask 7168
    %22 = vst.msk [vmem:[#allocation2] sm:$0xff] %vm21, -1e+08
    %23 = vst.msk [vmem:[#allocation4] sm:$0xff] %vm21, -1e+08
    %24 = vst.msk [vmem:[#allocation3] sm:$0xff] %vm21, 0.0
    %25 = vst.msk [vmem:[#allocation5] sm:$0xff] %vm21, 0.0
  $region21: #{tpu_custom_call.1} parent=0 // pred_fallthru
    _
  %v26 = vld [vmem:[%s0] sm:$0xff]
  %v27 = vmul.f32 %v26, %v26
  %vm28 = vcmask 261120
  %v29 = vsel %vm28, %v27, 0.0
  %30 = vadd.xlane.f32.xlu0 %v29
  %v31 = vpop.xlane.xlu0 %30
  %v32 = vmax.f32 %v31, 1e-24
  %v33 = vrsqrt.pop %v32
  %v34 = vmul.f32 %v26, %v33
  %v35 = vld [vmem:[%s1] sm:$0xff]
  %v36 = vld [vmem:[%s1 + $0x8] sm:$0xff]
  %v37 = vld [vmem:[%s1 + $0x10] sm:$0xff]
  %v38 = vld [vmem:[%s1 + $0x18] sm:$0xff]
  %v39 = vld [vmem:[%s1 + $0x20] sm:$0xff]
  %v40 = vld [vmem:[%s1 + $0x28] sm:$0xff]
  %v41 = vld [vmem:[%s1 + $0x30] sm:$0xff]
  %v42 = vld [vmem:[%s1 + $0x38] sm:$0xff]
  %v43 = vld [vmem:[%s1 + $0x40] sm:$0xff]
  %v44 = vld [vmem:[%s1 + $0x48] sm:$0xff]
  %v45 = vld [vmem:[%s1 + $0x50] sm:$0xff]
  %v46 = vld [vmem:[%s1 + $0x58] sm:$0xff]
  %v47 = vld [vmem:[%s1 + $0x60] sm:$0xff]
  %v48 = vld [vmem:[%s1 + $0x68] sm:$0xff]
  %v49 = vld [vmem:[%s1 + $0x70] sm:$0xff]
  %v50 = vld [vmem:[%s1 + $0x78] sm:$0xff]
  %v51 = vmul.f32 %v35, %v35
  %v52 = vmul.f32 %v36, %v36
  %v53 = vmul.f32 %v37, %v37
  %v54 = vmul.f32 %v38, %v38
  %v55 = vmul.f32 %v39, %v39
  %v56 = vmul.f32 %v40, %v40
  %v57 = vmul.f32 %v41, %v41
  %v58 = vmul.f32 %v42, %v42
  %v59 = vmul.f32 %v43, %v43
  %v60 = vmul.f32 %v44, %v44
  %v61 = vmul.f32 %v45, %v45
  %v62 = vmul.f32 %v46, %v46
  %v63 = vmul.f32 %v47, %v47
  %v64 = vmul.f32 %v48, %v48
  %v65 = vmul.f32 %v49, %v49
  %v66 = vmul.f32 %v50, %v50
  %v67 = vsel %vm28, %v51, 0.0
  %68 = vadd.xlane.f32.xlu0 %v67
  %v69 = vpop.xlane.xlu0 %68
  %v70 = vsel %vm28, %v52, 0.0
  %71 = vadd.xlane.f32.xlu0 %v70
  %v72 = vpop.xlane.xlu0 %71
  %v73 = vsel %vm28, %v53, 0.0
  %74 = vadd.xlane.f32.xlu0 %v73
  %v75 = vpop.xlane.xlu0 %74
  %v76 = vsel %vm28, %v54, 0.0
  %77 = vadd.xlane.f32.xlu0 %v76
  %v78 = vpop.xlane.xlu0 %77
  %v79 = vsel %vm28, %v55, 0.0
  %80 = vadd.xlane.f32.xlu0 %v79
  %v81 = vpop.xlane.xlu0 %80
  %v82 = vsel %vm28, %v56, 0.0
  %83 = vadd.xlane.f32.xlu0 %v82
  %v84 = vpop.xlane.xlu0 %83
  %v85 = vsel %vm28, %v57, 0.0
  %86 = vadd.xlane.f32.xlu0 %v85
  %v87 = vpop.xlane.xlu0 %86
  %v88 = vsel %vm28, %v58, 0.0
  %89 = vadd.xlane.f32.xlu0 %v88
  %v90 = vpop.xlane.xlu0 %89
  %v91 = vsel %vm28, %v59, 0.0
  %92 = vadd.xlane.f32.xlu0 %v91
  %v93 = vpop.xlane.xlu0 %92
  %v94 = vsel %vm28, %v60, 0.0
  %95 = vadd.xlane.f32.xlu0 %v94
  %v96 = vpop.xlane.xlu0 %95
  %v97 = vsel %vm28, %v61, 0.0
  %98 = vadd.xlane.f32.xlu0 %v97
  %v99 = vpop.xlane.xlu0 %98
  %v100 = vsel %vm28, %v62, 0.0
  %101 = vadd.xlane.f32.xlu0 %v100
  %v102 = vpop.xlane.xlu0 %101
  %v103 = vsel %vm28, %v63, 0.0
  %104 = vadd.xlane.f32.xlu0 %v103
  %v105 = vpop.xlane.xlu0 %104
  %v106 = vsel %vm28, %v64, 0.0
  %107 = vadd.xlane.f32.xlu0 %v106
  %v108 = vpop.xlane.xlu0 %107
  %v109 = vsel %vm28, %v65, 0.0
  %110 = vadd.xlane.f32.xlu0 %v109
  %v111 = vpop.xlane.xlu0 %110
  %v112 = vsel %vm28, %v66, 0.0
  %113 = vadd.xlane.f32.xlu0 %v112
  %v114 = vpop.xlane.xlu0 %113
  %v115 = vmax.f32 %v69, 1e-24
  %v116 = vmax.f32 %v72, 1e-24
  %v117 = vmax.f32 %v75, 1e-24
  %v118 = vmax.f32 %v78, 1e-24
  %v119 = vmax.f32 %v81, 1e-24
  %v120 = vmax.f32 %v84, 1e-24
  %v121 = vmax.f32 %v87, 1e-24
  %v122 = vmax.f32 %v90, 1e-24
  %v123 = vmax.f32 %v93, 1e-24
  %v124 = vmax.f32 %v96, 1e-24
  %v125 = vmax.f32 %v99, 1e-24
  %v126 = vmax.f32 %v102, 1e-24
  %v127 = vmax.f32 %v105, 1e-24
  %v128 = vmax.f32 %v108, 1e-24
  %v129 = vmax.f32 %v111, 1e-24
  %v130 = vmax.f32 %v114, 1e-24
  %v131 = vrsqrt.pop %v115
  %v132 = vrsqrt.pop %v116
  %v133 = vrsqrt.pop %v117
  %v134 = vrsqrt.pop %v118
  %v135 = vrsqrt.pop %v119
  %v136 = vrsqrt.pop %v120
  %v137 = vrsqrt.pop %v121
  %v138 = vrsqrt.pop %v122
  %v139 = vrsqrt.pop %v123
  %v140 = vrsqrt.pop %v124
  %v141 = vrsqrt.pop %v125
  %v142 = vrsqrt.pop %v126
  %v143 = vrsqrt.pop %v127
  %v144 = vrsqrt.pop %v128
  %v145 = vrsqrt.pop %v129
  %v146 = vrsqrt.pop %v130
  %v147 = vmul.f32 %v35, %v131
  %v148 = vmul.f32 %v36, %v132
  %v149 = vmul.f32 %v37, %v133
  %v150 = vmul.f32 %v38, %v134
  %v151 = vmul.f32 %v39, %v135
  %v152 = vmul.f32 %v40, %v136
  %v153 = vmul.f32 %v41, %v137
  %v154 = vmul.f32 %v42, %v138
  %v155 = vmul.f32 %v43, %v139
  %v156 = vmul.f32 %v44, %v140
  %v157 = vmul.f32 %v45, %v141
  %v158 = vmul.f32 %v46, %v142
  %v159 = vmul.f32 %v47, %v143
  %v160 = vmul.f32 %v48, %v144
  %v161 = vmul.f32 %v49, %v145
  %v162 = vmul.f32 %v50, %v146
  %v164 = vsel %vm28, %v34, 0
  %v167 = vsel %vm28, %v147, 0
  %v170 = vsel %vm28, %v148, 0
  %v173 = vsel %vm28, %v149, 0
  %v176 = vsel %vm28, %v150, 0
  %v179 = vsel %vm28, %v151, 0
  %v182 = vsel %vm28, %v152, 0
  %v185 = vsel %vm28, %v153, 0
  %v188 = vsel %vm28, %v154, 0
  %v191 = vsel %vm28, %v155, 0
  %v194 = vsel %vm28, %v156, 0
  %v197 = vsel %vm28, %v157, 0
  %v200 = vsel %vm28, %v158, 0
  %v203 = vsel %vm28, %v159, 0
  %v206 = vsel %vm28, %v160, 0
  %v209 = vsel %vm28, %v161, 0
  %v212 = vsel %vm28, %v162, 0
  %214 = vmatprep.subr.mxu0 0.0
  %215 = vmatpush1.xpose.msra.mxu0 %v212
  %216 = vmatprep.subr.mxu0 0.0
  %217 = vmatpush1.xpose.msra.mxu0 %v209
  %218 = vmatprep.subr.mxu0 0.0
  %219 = vmatpush1.xpose.msra.mxu0 %v206
  %220 = vmatprep.subr.mxu0 0.0
  %221 = vmatpush1.xpose.msra.mxu0 %v203
  %222 = vmatprep.subr.mxu0 0.0
  %223 = vmatpush1.xpose.msra.mxu0 %v200
  %224 = vmatprep.subr.mxu0 0.0
  %225 = vmatpush1.xpose.msra.mxu0 %v197
  %226 = vmatprep.subr.mxu0 0.0
  %227 = vmatpush1.xpose.msra.mxu0 %v194
  %228 = vmatprep.subr.mxu0 0.0
  %229 = vmatpush1.xpose.msra.mxu0 %v191
  %230 = vmatprep.subr.mxu0 0.0
  %231 = vmatpush1.xpose.msra.mxu0 %v188
  %232 = vmatprep.subr.mxu0 0.0
  %233 = vmatpush1.xpose.msra.mxu0 %v185
  %234 = vmatprep.subr.mxu0 0.0
  %235 = vmatpush1.xpose.msra.mxu0 %v182
  %236 = vmatprep.subr.mxu0 0.0
  %237 = vmatpush1.xpose.msra.mxu0 %v179
  %238 = vmatprep.subr.mxu0 0.0
  %239 = vmatpush1.xpose.msra.mxu0 %v176
  %240 = vmatprep.subr.mxu0 0.0
  %241 = vmatpush1.xpose.msra.mxu0 %v173
  %242 = vmatprep.subr.mxu0 0.0
  %243 = vmatpush1.xpose.msra.mxu0 %v170
  %244 = vmatprep.subr.mxu0 0.0
  %245 = vmatpush1.xpose.msra.mxu0 %v167
  %246 = vmatprep.subr.mxu0 0.0
  %247 = vmatpush2.xpose.msra.mxu0 0.0
  %248 = vmatprep.subr.mxu0 0.0
  %249 = vmatpush2.xpose.msra.mxu0 0.0
  %250 = vmatprep.subr.mxu0 0.0
  %251 = vmatpush2.xpose.msra.mxu0 0.0
  %252 = vmatprep.subr.mxu0 0.0
  %253 = vmatpush2.xpose.msra.mxu0 0.0
  %254 = vmatprep.subr.mxu0 0.0
  %255 = vmatpush2.xpose.msra.mxu0 0.0
  %256 = vmatprep.subr.mxu0 0.0
  %257 = vmatpush2.xpose.msra.mxu0 0.0
  %258 = vmatprep.subr.mxu0 0.0
  %259 = vmatpush2.xpose.msra.mxu0 0.0
  %260 = vmatprep.subr.mxu0 0.0
  %261 = vmatpush2.xpose.msra.mxu0 0.0
  %262 = vmatprep.subr.mxu0 0.0
  %263 = vmatpush2.xpose.msra.mxu0 0.0
  %264 = vmatprep.subr.mxu0 0.0
  %265 = vmatpush2.xpose.msra.mxu0 0.0
  %266 = vmatprep.subr.mxu0 0.0
  %267 = vmatpush2.xpose.msra.mxu0 0.0
  %268 = vmatprep.subr.mxu0 0.0
  %269 = vmatpush2.xpose.msra.mxu0 0.0
  %270 = vmatprep.subr.mxu0 0.0
  %271 = vmatpush2.xpose.msra.mxu0 0.0
  %272 = vmatprep.subr.mxu0 0.0
  %273 = vmatpush2.xpose.msra.mxu0 0.0
  %274 = vmatprep.subr.mxu0 0.0
  %275 = vmatpush2.xpose.msra.mxu0 0.0
  %276 = vmatprep.subr.mxu0 0.0
  %277 = vmatpush2.xpose.msra.mxu0 0.0
  %278 = vmatprep.mubr.f32.mxu0 0.0
  %279 = vmatmul.mubr.f32.gmra.mxu0 %v164
  %v280 = vpop.f32.mrf.mxu0
  %v281 = vadd.f32 0.0, %v280
  %v282 = vpop.f32.mrf.mxu0
  %283 = vdwg.mxu0
  %v284 = vld [vmem:[%s2] sm:$0xff]
  %v285 = vld [vmem:[%s3] sm:$0x1]
  %286 = vset.pattern.permute.xlu0 0
  %287 = vperm.xlu0 %286, %v284
  %v288 = vpop.permute.xlu0 %287
  %v289 = vlaneseq
  %v290 = vshrl.u32 %v289, 7
  %v291 = vsub.s32 0, %v290
  %v292 = vrot.slane %v285, %v291
  %vm293 = vcmp.eq.s32.totalorder %v288, %v292
  %v294 = vlaneseq
  %v295 = vshrl.u32 %v294, 7
  %s296 = smul.u32 0, 8
  %v297 = vstv %s296
  %v298 = vadd.s32 %v295, %v297
  %v299 = vlaneseq
  %v300 = vand.u32 %v299, 127
  %s301 = smul.u32 0, 128
  %v302 = vstv %s301
  %v303 = vadd.s32 %v300, %v302
  %vm304 = vcmp.ne.s32.totalorder %v298, %v303
  %vm305 = vmand %vm293, %vm304
  %vm306 = vmxor %vm293, 1
  %vm307 = vcmp.lt.s32.totalorder %v303, 8
  %vm308 = vmand %vm305, %vm307
  %vm309 = vmand %vm306, %vm307
  %v310 = vsub.f32 1.3, %v281
  %v311 = vmax.f32 %v310, 0.0
  %v312 = vmul.f32 %v311, -30.0
  %v313 = vsub.f32 %v281, 0.7
  %v314 = vmul.f32 %v312, %v313
  %v315 = vsel %vm308, %v314, -1e+08
  %v316 = vadd.f32 %v281, 0.3
  %v317 = vmax.f32 %v316, 0.0
  %v318 = vmul.f32 %v317, 30.0
  %v319 = vsub.f32 %v281, 0.3
  %v320 = vmul.f32 %v318, %v319
  %v321 = vsel %vm309, %v320, -1e+08
  %v322 = vld [vmem:[#allocation2] sm:$0xff]
  %323 = vmax.xlane.f32.xlu0 %v315
  %v324 = vpop.xlane.xlu0 %323
  %v325 = vmax.f32 %v322, %v324
  %v326 = vld [vmem:[#allocation3] sm:$0xff]
  %v327 = vsub.f32 %v322, %v325
  %v328 = vmul.f32 %v327, 1.442695
  %v329 = vpow.pop %v328
  %v330 = vmul.f32 %v326, %v329
  %332 = vset.pattern.permute.xlu0 0
  %333 = vperm.xlu0 %332, %v325
  %v334 = vpop.permute.xlu0 %333
  %v336 = vsub.f32 %v315, %v334
  %v337 = vmul.f32 %v336, 1.442695
  %v338 = vpow.pop %v337
  %339 = vadd.xlane.f32.xlu0 %v338
  %v340 = vpop.xlane.xlu0 %339
  %v341 = vadd.f32 %v330, %v340
  %vm342 = vcmask 7168
  %343 = vst.msk [vmem:[#allocation3] sm:$0xff] %vm342, %v341
  %344 = vst.msk [vmem:[#allocation2] sm:$0xff] %vm342, %v325
  %v345 = vld [vmem:[#allocation4] sm:$0xff]
  %346 = vmax.xlane.f32.xlu0 %v321
  %v347 = vpop.xlane.xlu0 %346
  %v348 = vmax.f32 %v345, %v347
  %v349 = vld [vmem:[#allocation5] sm:$0xff]
  %v350 = vsub.f32 %v345, %v348
  %v351 = vmul.f32 %v350, 1.442695
  %v352 = vpow.pop %v351
  %v353 = vmul.f32 %v349, %v352
  %355 = vset.pattern.permute.xlu0 0
  %356 = vperm.xlu0 %355, %v348
  %v357 = vpop.permute.xlu0 %356
  %v359 = vsub.f32 %v321, %v357
  %v360 = vmul.f32 %v359, 1.442695
  %v361 = vpow.pop %v360
  %362 = vadd.xlane.f32.xlu0 %v361
  %v363 = vpop.xlane.xlu0 %362
  %v364 = vadd.f32 %v353, %v363
  %365 = vst.msk [vmem:[#allocation5] sm:$0xff] %vm342, %v364
  %366 = vst.msk [vmem:[#allocation4] sm:$0xff] %vm342, %v348
  // Predicated region
  $region22: #{tpu_custom_call.1} parent=0 // pred_check
    %p367 = pneg %p17
  $region23: #{tpu_custom_call.1} parent=0 // pred_check_branch
    %369 = sbr.rel (%p367) target = $region25
  $region24: #{tpu_custom_call.1} parent=0 // pred_region
    %v370 = vld [vmem:[#allocation2] sm:$0xff]
    %v371 = vld [vmem:[#allocation3] sm:$0xff]
    %v372 = vlog2.pop %v371
    %v373 = vmul.f32 %v372, 0.6931472
    %v374 = vadd.f32 %v370, %v373
    %v375 = vld [vmem:[#allocation4] sm:$0xff]
    %v376 = vadd.f32 %v374, %v375
    %v377 = vld [vmem:[#allocation5] sm:$0xff]
    %v378 = vlog2.pop %v377
    %v379 = vmul.f32 %v378, 0.6931472
    %v380 = vadd.f32 %v376, %v379
    %v381 = vmax.f32 %v380, 0.0
    %v382 = vand.u32 2147483647, %v380
    %v383 = vsub.f32 0.0, %v382
    %v384 = vmul.f32 %v383, 1.442695
    %v385 = vpow.pop %v384
    %v386 = vadd.f32 %v385, 1.0
    %v387 = vlog2.pop %v386
    %v388 = vmul.f32 %v387, 0.6931472
    %v389 = vmul.f32 -0.5, %v385
    %v390 = vadd.f32 %v389, 1.0
    %v391 = vmul.f32 %v390, %v385
    %v392 = vand.u32 2147483647, %v385
    %vm393 = vcmp.lt.f32.partialorder %v392, 0.0004427343
    %v394 = vsel %vm393, %v391, %v388
    %v395 = vadd.f32 %v381, %v394
    %396 = vst.msk [vmem:[%s4] sm:$0xff] %vm342, %v395
  $region25: #{tpu_custom_call.1} parent=0 // pred_fallthru
    _
  // Predicated region
  $region26: #{tpu_custom_call.1} parent=0 // pred_check
    _
  $region27: #{tpu_custom_call.1} parent=0 // pred_check_branch
    %398 = sbr.rel (0) target = $region29
  $region28: #{tpu_custom_call.1} parent=0 // pred_region
    _
  $region29: #{tpu_custom_call.1} parent=0 // pred_fallthru
    _
  // Predicated region
  $region30: #{tpu_custom_call.1} parent=0 // pred_check
    _
  $region31: #{tpu_custom_call.1} parent=0 // pred_check_branch
    %400 = sbr.rel (0) target = $region33
  $region32: #{tpu_custom_call.1} parent=0 // pred_region
    _
  $region33: #{tpu_custom_call.1} parent=0 // pred_fallthru
    _

</llo_original>
